<compile_context>
chip_gen: v6e
topology: v6e:2x2x1
jax: 0.10.0
libtpu: 0.0.40
codegen_flags: <defaults>
</compile_context>

<pallas_src>
import functools

import jax
import jax.numpy as jnp
from jax.experimental import pallas as pl
from jax.experimental.pallas import tpu as pltpu


def _pair(v):
    if isinstance(v, (tuple, list)):
        assert len(v) == 2
        return int(v[0]), int(v[1])
    return int(v), int(v)


def _idw_pool_kernel(p_ref, o_ref):
    """p_ref: (kk, R, S) window planes (input dtype); o_ref: (R, S) pooled output (f32)."""
    kk = p_ref.shape[0]
    planes = [p_ref[i].astype(jnp.float32) for i in range(kk)]

    # Window mean.
    s = planes[0]
    for q in planes[1:]:
        s = s + q
    avg = s * jnp.float32(1.0 / kk)

    # Inverse-distance weights.  Reciprocals go to the EUP (approx=True); the
    # where-guard keeps the exact d == 0 -> inf -> NaN -> 0 semantics of the CUDA op.
    inf = jnp.float32(jnp.inf)
    num = jnp.zeros_like(avg)
    den = jnp.zeros_like(avg)
    for q in planes:
        d = jnp.abs(q - avg)
        inv = jnp.where(d == 0.0, inf, pl.reciprocal(d, approx=True))
        num = num + q * inv
        den = den + inv

    out = num * pl.reciprocal(den, approx=True)   # den > 0 (sum of inverse distances)
    o_ref[...] = jnp.nan_to_num(out).astype(o_ref.dtype)


def _choose_tiles(N, S, kk, itemsize):
    # Lane (last-dim) tile: keep full if it fits comfortably, else a multiple of 128.
    s_tile = S if S <= 8192 else 4096
    # Per-block element budget, bounded both by the (double-buffered) input block
    # (~4 MiB) and by the f32 temporaries the kernel materializes (~kk + 5 slabs,
    # ~16 MiB).  Row tile is a multiple of 8 sublanes (or full N).
    elems = min((4 * 1024 * 1024) // max(1, kk * itemsize),
                (16 * 1024 * 1024) // ((kk + 5) * 4))
    r_tile = max(8, (elems // max(1, s_tile) // 8) * 8)
    r_tile = min(r_tile, 1024)
    if N <= r_tile:
        r_tile = N
    return r_tile, s_tile


@functools.partial(jax.jit, static_argnames=("kh", "kw", "sh", "sw"))
def _idwpool2d_impl(x, kh, kw, sh, sw):
    B, C, H, W = x.shape
    oH = (H - kh) // sh + 1
    oW = (W - kw) // sw + 1
    N = B * C
    S = oH * oW
    kk = kh * kw

    xr = x.reshape(N, H, W)
    # Window "planes": planes[ky*kw+kx][n, oh, ow] = x[n, oh*sh + ky, ow*sw + kx].
    # Pure layout plumbing done by XLA strided slices; kept in the original dtype.
    planes = [
        xr[:, ky:ky + (oH - 1) * sh + 1:sh, kx:kx + (oW - 1) * sw + 1:sw]
        for ky in range(kh) for kx in range(kw)
    ]
    p = jnp.stack(planes, axis=0).reshape(kk, N, S)

    r_tile, s_tile = _choose_tiles(N, S, kk, x.dtype.itemsize)
    grid = (pl.cdiv(N, r_tile), pl.cdiv(S, s_tile))

    # Explicit VMEM budget: double-buffered input/output blocks + kernel temporaries.
    block_in = kk * r_tile * s_tile * x.dtype.itemsize
    block_out = r_tile * s_tile * 4
    vmem_needed = 2 * (block_in + block_out) + (kk + 6) * r_tile * s_tile * 4
    vmem_limit = int(min(max(2 * vmem_needed, 16 * 1024 * 1024), 48 * 1024 * 1024))

    out = pl.pallas_call(
        _idw_pool_kernel,
        out_shape=jax.ShapeDtypeStruct((N, S), jnp.float32),
        grid=grid,
        in_specs=[pl.BlockSpec((kk, r_tile, s_tile), lambda r, s: (0, r, s))],
        out_specs=pl.BlockSpec((r_tile, s_tile), lambda r, s: (r, s)),
        compiler_params=pltpu.CompilerParams(
            dimension_semantics=("parallel", "parallel"),
            vmem_limit_bytes=vmem_limit,
        ),
    )(p)

    return out.reshape(B, C, oH, oW)


def idwpool2d(x, kernel_size=2, stride=None, return_mask=False):
    """IDWPool2d forward. x: (B, C, H, W) or (C, H, W). Returns float32 pooled output."""
    if return_mask:
        # TODO(synk): return_mask=True path (per-window IDW weight mask) not implemented.
        raise NotImplementedError("return_mask=True is not supported in the Pallas port")
    kh, kw = _pair(kernel_size)
    if stride is None:
        sh, sw = kh, kw
    else:
        sh, sw = _pair(stride)
    no_batch = x.ndim == 3
    if no_batch:
        x = x[None]
    out = _idwpool2d_impl(x, kh, kw, sh, sw)
    if no_batch:
        out = out[0]
    return out


class IDWPool2d:
    """JAX/Pallas port of the PyTorch IDWPool2d module (no learnable parameters)."""

    def __init__(self, kernel_size=2, stride=None, return_mask=False):
        if stride is None:
            stride = kernel_size
        self.kernel_size = _pair(kernel_size)
        self.stride = _pair(stride)
        self.return_mask = return_mask
        # TODO(synk): return_mask=True (flattened (B, kh*oH, kw*oW) mask) not implemented.

    def __call__(self, x):
        return idwpool2d(x, kernel_size=self.kernel_size, stride=self.stride,
                         return_mask=False)


def _reference(x, kernel, stride):
    # Pure-JAX reference (same IDW math) for sanity checking.
    kh, kw = kernel
    sh, sw = stride
    B, C, H, W = x.shape
    oH = (H - kh) // sh + 1
    oW = (W - kw) // sw + 1
    xf = x.astype(jnp.float32)
    planes = jnp.stack(
        [xf[:, :, ky:ky + (oH - 1) * sh + 1:sh, kx:kx + (oW - 1) * sw + 1:sw]
         for ky in range(kh) for kx in range(kw)], axis=0)   # (kk, B, C, oH, oW)
    avg = jnp.mean(planes, axis=0)
    inv = 1.0 / jnp.abs(planes - avg[None])
    out = jnp.sum(planes * inv, axis=0) / jnp.sum(inv, axis=0)
    return jnp.nan_to_num(out)


if __name__ == "__main__":
    key = jax.random.PRNGKey(0)

    # Case 1: default 2x2 pooling, small batched input.
    B, C, H, W = 2, 4, 16, 16
    x = jax.random.normal(key, (B, C, H, W), dtype=jnp.float32)
    pool = IDWPool2d(kernel_size=2)            # stride defaults to kernel_size
    y = jax.block_until_ready(pool(x))
    assert y.shape == (B, C, 8, 8)
    y_ref = _reference(x, (2, 2), (2, 2))
    err = float(jnp.max(jnp.abs(y - y_ref)))
    assert err < 2e-2, f"case1 mismatch vs reference: {err}"

    # Case 2: no-batch input, 3x3 kernel, stride 2 (overlapping windows), odd sizes.
    k2 = jax.random.fold_in(key, 1)
    x2 = jax.random.normal(k2, (4, 11, 13), dtype=jnp.float32)
    y2 = jax.block_until_ready(idwpool2d(x2, kernel_size=3, stride=2))
    assert y2.shape == (4, 5, 6)
    y2_ref = _reference(x2[None], (3, 3), (2, 2))[0]
    err2 = float(jnp.max(jnp.abs(y2 - y2_ref)))
    assert err2 < 2e-2, f"case2 mismatch vs reference: {err2}"

    # Case 3: larger flattened row count (N = 1024) so row tiling is exercised.
    k3 = jax.random.fold_in(key, 2)
    x3 = jax.random.normal(k3, (16, 64, 16, 16), dtype=jnp.float32)
    y3 = jax.block_until_ready(idwpool2d(x3, kernel_size=2))
    assert y3.shape == (16, 64, 8, 8)
    y3_ref = _reference(x3, (2, 2), (2, 2))
    err3 = float(jnp.max(jnp.abs(y3 - y3_ref)))
    assert err3 < 2e-2, f"case3 mismatch vs reference: {err3}"

    print("KERNEL_OK")
</pallas_src>

<mosaic_0001>
module attributes {stable_mosaic.version = 11 : i64} {
  func.func @_idw_pool_kernel(%arg0: i32, %arg1: i32, %arg2: memref<4x8x64xf32, #tpu.memory_space<vmem>>, %arg3: memref<8x64xf32, #tpu.memory_space<vmem>>) attributes {dimension_semantics = [#tpu.dimension_semantics<parallel>, #tpu.dimension_semantics<parallel>], iteration_bounds = array<i64: 1, 1>, scalar_prefetch = 0 : i64, scratch_operands = 0 : i64, tpu.core_type = #tpu.core_type<tc>, window_params = [{transform_indices = @transform_0, window_bounds = array<i64: 4, 8, 64>}, {transform_indices = @transform_1, window_bounds = array<i64: 8, 64>}]} {
    %c0 = arith.constant 0 : index
    %c0_0 = arith.constant 0 : index
    %c0_1 = arith.constant 0 : index
    %0 = vector.load %arg2[%c0, %c0_0, %c0_1] : memref<4x8x64xf32, #tpu.memory_space<vmem>>, vector<1x8x64xf32>
    %1 = vector.shape_cast %0 : vector<1x8x64xf32> to vector<8x64xf32>
    %c1 = arith.constant 1 : index
    %c0_2 = arith.constant 0 : index
    %c0_3 = arith.constant 0 : index
    %2 = vector.load %arg2[%c1, %c0_2, %c0_3] : memref<4x8x64xf32, #tpu.memory_space<vmem>>, vector<1x8x64xf32>
    %3 = vector.shape_cast %2 : vector<1x8x64xf32> to vector<8x64xf32>
    %c2 = arith.constant 2 : index
    %c0_4 = arith.constant 0 : index
    %c0_5 = arith.constant 0 : index
    %4 = vector.load %arg2[%c2, %c0_4, %c0_5] : memref<4x8x64xf32, #tpu.memory_space<vmem>>, vector<1x8x64xf32>
    %5 = vector.shape_cast %4 : vector<1x8x64xf32> to vector<8x64xf32>
    %c3 = arith.constant 3 : index
    %c0_6 = arith.constant 0 : index
    %c0_7 = arith.constant 0 : index
    %6 = vector.load %arg2[%c3, %c0_6, %c0_7] : memref<4x8x64xf32, #tpu.memory_space<vmem>>, vector<1x8x64xf32>
    %7 = vector.shape_cast %6 : vector<1x8x64xf32> to vector<8x64xf32>
    %8 = arith.addf %1, %3 : vector<8x64xf32>
    %9 = arith.addf %8, %5 : vector<8x64xf32>
    %10 = arith.addf %9, %7 : vector<8x64xf32>
    %cst = arith.constant 2.500000e-01 : f32
    %11 = vector.broadcast %cst : f32 to vector<8x64xf32>
    %12 = arith.mulf %10, %11 : vector<8x64xf32>
    %cst_8 = arith.constant 0.000000e+00 : f32
    %13 = vector.broadcast %cst_8 : f32 to vector<8x64xf32>
    %cst_9 = arith.constant 0.000000e+00 : f32
    %14 = vector.broadcast %cst_9 : f32 to vector<8x64xf32>
    %15 = arith.subf %1, %12 : vector<8x64xf32>
    %16 = math.absf %15 : vector<8x64xf32>
    %cst_10 = arith.constant 0.000000e+00 : f32
    %17 = vector.broadcast %cst_10 : f32 to vector<8x64xf32>
    %18 = arith.cmpf oeq, %16, %17 : vector<8x64xf32>
    %19 = tpu.reciprocal %16 {approx = true} : vector<8x64xf32> -> vector<8x64xf32>
    %cst_11 = arith.constant 0x7F800000 : f32
    %20 = vector.broadcast %cst_11 : f32 to vector<8x64xf32>
    %21 = arith.select %18, %20, %19 : vector<8x64xi1>, vector<8x64xf32>
    %22 = arith.mulf %1, %21 : vector<8x64xf32>
    %23 = arith.addf %13, %22 : vector<8x64xf32>
    %24 = arith.addf %14, %21 : vector<8x64xf32>
    %25 = arith.subf %3, %12 : vector<8x64xf32>
    %26 = math.absf %25 : vector<8x64xf32>
    %cst_12 = arith.constant 0.000000e+00 : f32
    %27 = vector.broadcast %cst_12 : f32 to vector<8x64xf32>
    %28 = arith.cmpf oeq, %26, %27 : vector<8x64xf32>
    %29 = tpu.reciprocal %26 {approx = true} : vector<8x64xf32> -> vector<8x64xf32>
    %cst_13 = arith.constant 0x7F800000 : f32
    %30 = vector.broadcast %cst_13 : f32 to vector<8x64xf32>
    %31 = arith.select %28, %30, %29 : vector<8x64xi1>, vector<8x64xf32>
    %32 = arith.mulf %3, %31 : vector<8x64xf32>
    %33 = arith.addf %23, %32 : vector<8x64xf32>
    %34 = arith.addf %24, %31 : vector<8x64xf32>
    %35 = arith.subf %5, %12 : vector<8x64xf32>
    %36 = math.absf %35 : vector<8x64xf32>
    %cst_14 = arith.constant 0.000000e+00 : f32
    %37 = vector.broadcast %cst_14 : f32 to vector<8x64xf32>
    %38 = arith.cmpf oeq, %36, %37 : vector<8x64xf32>
    %39 = tpu.reciprocal %36 {approx = true} : vector<8x64xf32> -> vector<8x64xf32>
    %cst_15 = arith.constant 0x7F800000 : f32
    %40 = vector.broadcast %cst_15 : f32 to vector<8x64xf32>
    %41 = arith.select %38, %40, %39 : vector<8x64xi1>, vector<8x64xf32>
    %42 = arith.mulf %5, %41 : vector<8x64xf32>
    %43 = arith.addf %33, %42 : vector<8x64xf32>
    %44 = arith.addf %34, %41 : vector<8x64xf32>
    %45 = arith.subf %7, %12 : vector<8x64xf32>
    %46 = math.absf %45 : vector<8x64xf32>
    %cst_16 = arith.constant 0.000000e+00 : f32
    %47 = vector.broadcast %cst_16 : f32 to vector<8x64xf32>
    %48 = arith.cmpf oeq, %46, %47 : vector<8x64xf32>
    %49 = tpu.reciprocal %46 {approx = true} : vector<8x64xf32> -> vector<8x64xf32>
    %cst_17 = arith.constant 0x7F800000 : f32
    %50 = vector.broadcast %cst_17 : f32 to vector<8x64xf32>
    %51 = arith.select %48, %50, %49 : vector<8x64xi1>, vector<8x64xf32>
    %52 = arith.mulf %7, %51 : vector<8x64xf32>
    %53 = arith.addf %43, %52 : vector<8x64xf32>
    %54 = arith.addf %44, %51 : vector<8x64xf32>
    %55 = tpu.reciprocal %54 {approx = true} : vector<8x64xf32> -> vector<8x64xf32>
    %56 = arith.mulf %53, %55 : vector<8x64xf32>
    %57 = arith.cmpf one, %56, %56 : vector<8x64xf32>
    %cst_18 = arith.constant 0.000000e+00 : f32
    %58 = vector.broadcast %cst_18 : f32 to vector<8x64xf32>
    %59 = arith.select %57, %58, %56 : vector<8x64xi1>, vector<8x64xf32>
    %cst_19 = arith.constant 0x7F800000 : f32
    %60 = vector.broadcast %cst_19 : f32 to vector<8x64xf32>
    %61 = arith.cmpf oeq, %59, %60 : vector<8x64xf32>
    %cst_20 = arith.constant 3.40282347E+38 : f32
    %62 = vector.broadcast %cst_20 : f32 to vector<8x64xf32>
    %63 = arith.select %61, %62, %59 : vector<8x64xi1>, vector<8x64xf32>
    %cst_21 = arith.constant 0xFF800000 : f32
    %64 = vector.broadcast %cst_21 : f32 to vector<8x64xf32>
    %65 = arith.cmpf oeq, %63, %64 : vector<8x64xf32>
    %cst_22 = arith.constant -3.40282347E+38 : f32
    %66 = vector.broadcast %cst_22 : f32 to vector<8x64xf32>
    %67 = arith.select %65, %66, %63 : vector<8x64xi1>, vector<8x64xf32>
    %c0_23 = arith.constant 0 : index
    %c0_24 = arith.constant 0 : index
    %68 = vector.load %arg3[%c0_23, %c0_24] : memref<8x64xf32, #tpu.memory_space<vmem>>, vector<8x64xf32>
    tpu.vector_store %arg3[%c0_23, %c0_24], %67 {strides = array<i32>} : memref<8x64xf32, #tpu.memory_space<vmem>>, vector<8x64xf32>,
    return
  }
  func.func @transform_0(%arg0: i32, %arg1: i32) -> (i32, i32, i32) {
    %c0_i32 = arith.constant 0 : i32
    %c0_i32_0 = arith.constant 0 : i32
    return %c0_i32, %arg0, %arg1 : i32, i32, i32
  }
  func.func @transform_1(%arg0: i32, %arg1: i32) -> (i32, i32) {
    %c0_i32 = arith.constant 0 : i32
    return %arg0, %arg1 : i32, i32
  }
}

</mosaic_0001>

<llo_original>
// kernel: _idwpool2d_impl.1
$region0: #{_idwpool2d_impl.1}
  #allocation0 [shape = 'u32[]', space=smem, size = 0x4, offset = 0x4, fixed_abs, tag = 'smem constant byte address 0x4 - core index']
  #allocation1 [shape = 'u32[144,128]{1,0:T(1,128)}', space=vmem, size = 0x12000, scoped, tag = 'internal scratch']
  %s0 = inlined_call_operand.vmem [shape: f32[4,8,64], index: 0, kind: input, shape index: {}]
  %s1 = inlined_call_operand.vmem [shape: f32[8,64], index: 1, kind: output, shape index: {}]
  %s2 = sld [smem:[#allocation0]]
  $region14: #{_idwpool2d_impl.1} parent=0
    _
  %s4 = ssub.s32 1, %s2
  %s5 = scalar_select 0, %s4, %s2
  // Predicated region
  $region2: #{_idwpool2d_impl.1} parent=0 // pred_check
    _
  $region3: #{_idwpool2d_impl.1} parent=0 // pred_check_branch
    %7 = sbr.rel (0) target = $region5
  $region4: #{_idwpool2d_impl.1} parent=0 // pred_region
    _
  $region5: #{_idwpool2d_impl.1} parent=0 // pred_fallthru
    _
  %v8 = vld [vmem:[%s0] sm:$0xff]
  %s9 = scalar_lea.vmem %s0, 8
  %v10 = vld [vmem:[%s9] sm:$0xff]
  %s11 = scalar_lea.vmem %s0, 16
  %v12 = vld [vmem:[%s11] sm:$0xff]
  %s13 = scalar_lea.vmem %s0, 24
  %v14 = vld [vmem:[%s13] sm:$0xff]
  %v15 = vadd.f32 %v8, %v10
  %v16 = vadd.f32 %v15, %v12
  %v17 = vadd.f32 %v16, %v14
  %v18 = vmul.f32 %v17, 0.25
  %v19 = vsub.f32 %v8, %v18
  %v20 = vand.u32 2147483647, %v19
  %vm21 = vcmp.eq.f32.partialorder %v20, 0.0
  %v22 = vrcp.pop %v20
  %v23 = vsel %vm21, inf, %v22
  %v24 = vmul.f32 %v8, %v23
  %v25 = vadd.f32 %v24, 0.0
  %v26 = vadd.f32 %v23, 0.0
  %v27 = vsub.f32 %v10, %v18
  %v28 = vand.u32 2147483647, %v27
  %vm29 = vcmp.eq.f32.partialorder %v28, 0.0
  %v30 = vrcp.pop %v28
  %v31 = vsel %vm29, inf, %v30
  %v32 = vmul.f32 %v10, %v31
  %v33 = vadd.f32 %v25, %v32
  %v34 = vadd.f32 %v26, %v31
  %v35 = vsub.f32 %v12, %v18
  %v36 = vand.u32 2147483647, %v35
  %vm37 = vcmp.eq.f32.partialorder %v36, 0.0
  %v38 = vrcp.pop %v36
  %v39 = vsel %vm37, inf, %v38
  %v40 = vmul.f32 %v12, %v39
  %v41 = vadd.f32 %v33, %v40
  %v42 = vadd.f32 %v34, %v39
  %v43 = vsub.f32 %v14, %v18
  %v44 = vand.u32 2147483647, %v43
  %vm45 = vcmp.eq.f32.partialorder %v44, 0.0
  %v46 = vrcp.pop %v44
  %v47 = vsel %vm45, inf, %v46
  %v48 = vmul.f32 %v14, %v47
  %v49 = vadd.f32 %v41, %v48
  %v50 = vadd.f32 %v42, %v47
  %v51 = vrcp.pop %v50
  %v52 = vmul.f32 %v49, %v51
  %vm53 = vcmp.ne.f32.partialorder %v52, %v52
  %v54 = vsel %vm53, 0.0, %v52
  %vm55 = vcmp.eq.f32.partialorder %v54, inf
  %v56 = vsel %vm55, 3.4028235e+38, %v54
  %vm57 = vcmp.eq.f32.partialorder %v56, -inf
  %v58 = vsel %vm57, -3.4028235e+38, %v56
  %vm59 = vcmask 523264
  %60 = vst.msk [vmem:[%s1] sm:$0xff] %vm59, %v58
  // Predicated region
  $region6: #{_idwpool2d_impl.1} parent=0 // pred_check
    _
  $region7: #{_idwpool2d_impl.1} parent=0 // pred_check_branch
    %62 = sbr.rel (0) target = $region9
  $region8: #{_idwpool2d_impl.1} parent=0 // pred_region
    _
  $region9: #{_idwpool2d_impl.1} parent=0 // pred_fallthru
    _
  // Predicated region
  $region10: #{_idwpool2d_impl.1} parent=0 // pred_check
    _
  $region11: #{_idwpool2d_impl.1} parent=0 // pred_check_branch
    %64 = sbr.rel (0) target = $region13
  $region12: #{_idwpool2d_impl.1} parent=0 // pred_region
    _
  $region13: #{_idwpool2d_impl.1} parent=0 // pred_fallthru
    _

</llo_original>
